<compile_context>
chip_gen: v5e
topology: v5e:2x2
jax: 0.10.0
libtpu: 0.0.40
codegen_flags: <defaults>
</compile_context>

<pallas_src>
import functools

import jax
import jax.numpy as jnp
from jax import lax
from jax.experimental import pallas as pl
from jax.experimental.pallas import tpu as pltpu


_LANE_CANDIDATES = (1024, 512, 256, 128)   # preferred lane widths (free reshape)
_FALLBACK_LANES = 256                      # pad fallback lane width (rare path)
_DEF_BLOCK_ROWS = 512                      # 512 x 1024 x 4B = 2 MiB / input / step


def _giou_tile_kernel(pred_ref, gt_ref, loss_out_ref, cnt_out_ref, *,
                      eps, rows_valid, mask_rows):
    """Per-tile partial sums of the 1-D IoU loss.

    pred_ref / gt_ref hold an interleaved tile: lanes (2k, 2k+1) of a row are
    (start offset, end offset) of pair k, i.e. exactly the flattened memory
    layout of the (N, L, 2) inputs.
    """
    p = pred_ref[...].astype(jnp.float32)
    g = gt_ref[...].astype(jnp.float32)
    r, c = p.shape

    # One XLU rotation per operand brings each lane's pair partner alongside.
    p_pair = pltpu.roll(p, c - 1, axis=1)
    g_pair = pltpu.roll(g, c - 1, axis=1)

    # Data-independent "coherent lane" mask: lane j contributes iff its rolled
    # partner came from lane j ^ 1 (the other half of the SAME pair).  Built
    # from constants (loop-invariant) and correct for either rotation
    # direction, because the IoU formula below is symmetric in the two
    # channels of a pair.  Each pair is counted exactly once.
    lane = lax.broadcasted_iota(jnp.int32, (r, c), 1)
    partner_lane = pltpu.roll(lane, c - 1, axis=1)
    valid = partner_lane == (lane ^ 1)

    # mask = ~(gt_offsets < 0).any(-1)
    valid = jnp.logical_and(valid, jnp.logical_and(g >= 0.0, g_pair >= 0.0))

    if mask_rows:
        # Ragged last block: rows beyond the real extent hold undefined data.
        row = lax.broadcasted_iota(jnp.int32, (r, c), 0) + pl.program_id(0) * r
        valid = jnp.logical_and(valid, row < rows_valid)

    # starts = -offset[..., 0], ends = offset[..., 1]
    # inter  = clamp(min(p_end, g_end) - max(-p_start, -g_start), 0)
    #        = clamp(min(p_end, g_end) + min(p_start, g_start), 0)
    inter = jnp.maximum(jnp.minimum(p, g) + jnp.minimum(p_pair, g_pair), 0.0)
    union = (p + p_pair) + (g + g_pair) - inter      # pred_len + gt_len - inter
    union = jnp.maximum(union, eps)

    # EUP approximate reciprocal + one Newton step (cheaper than a full f32
    # divide, keeps ~1e-7 relative error).
    recip = pl.reciprocal(union, approx=True)
    recip = recip * (2.0 - union * recip)
    loss = 1.0 - inter * recip

    loss_out_ref[0, 0] = jnp.sum(jnp.where(valid, loss, 0.0))
    cnt_out_ref[0, 0] = jnp.sum(valid.astype(jnp.float32))


def _choose_lanes(total):
    for w in _LANE_CANDIDATES:
        if total % w == 0:
            return w, False
    return _FALLBACK_LANES, True          # rare: needs a small pad copy


def generalized_iou_loss(pred_offsets, gt_offsets, *, reduction="mean",
                         eps=1e-8, block_rows=_DEF_BLOCK_ROWS):
    """Pallas implementation of GeneralizedIoU.forward for reduction in {'mean','sum'}."""
    assert pred_offsets.shape == gt_offsets.shape
    assert pred_offsets.ndim == 3 and pred_offsets.shape[-1] == 2
    assert reduction in ("mean", "sum")
    # TODO(synk): reduction='none' (unreduced per-element loss map) not implemented.

    n, l, _ = pred_offsets.shape
    total = 2 * n * l

    pred_flat = pred_offsets.reshape(total)   # free contiguous flatten
    gt_flat = gt_offsets.reshape(total)

    lanes, needs_pad = _choose_lanes(total)
    if needs_pad:
        # Rare path: 2*N*L not a multiple of 128.  Pad to the next multiple of
        # the lane width; padded gt pairs are -1 so they are masked out.
        padded_total = -(-total // lanes) * lanes
        pred_flat = jnp.pad(pred_flat, (0, padded_total - total))
        gt_flat = jnp.pad(gt_flat, (0, padded_total - total), constant_values=-1.0)
    else:
        padded_total = total

    rows = padded_total // lanes
    pred2d = pred_flat.reshape(rows, lanes)
    gt2d = gt_flat.reshape(rows, lanes)

    # Row tile: ~2 MiB per input per step by default, multiple of 8 sublanes,
    # and at least two grid blocks whenever possible (keeps both v7x
    # TensorCores busy via the "parallel" grid axis).
    if rows <= 8:
        row_tile = rows                            # single block, full extent
    else:
        by_bytes = max(8, (block_rows * 1024 // lanes) // 8 * 8)
        half = -(-rows // 2)
        half = max(8, -(-half // 8) * 8)
        row_tile = max(8, min(by_bytes, half))
        if row_tile >= rows:
            row_tile = rows
    num_blocks = -(-rows // row_tile)
    mask_rows = num_blocks * row_tile != rows      # ragged last block?

    kernel = functools.partial(_giou_tile_kernel, eps=float(eps),
                               rows_valid=rows, mask_rows=mask_rows)

    in_spec = pl.BlockSpec((row_tile, lanes), lambda i: (i, 0))
    out_spec = pl.BlockSpec((1, 1), lambda i: (i, 0),
                            memory_space=pltpu.MemorySpace.SMEM)

    tile_bytes = row_tile * lanes * 4
    vmem_limit = int(min(56 * 1024 * 1024, max(32 * 1024 * 1024, 12 * tile_bytes)))

    loss_part, cnt_part = pl.pallas_call(
        kernel,
        grid=(num_blocks,),
        in_specs=[in_spec, in_spec],
        out_specs=[out_spec, out_spec],
        out_shape=[jax.ShapeDtypeStruct((num_blocks, 1), jnp.float32),
                   jax.ShapeDtypeStruct((num_blocks, 1), jnp.float32)],
        compiler_params=pltpu.CompilerParams(
            dimension_semantics=("parallel",),
            vmem_limit_bytes=vmem_limit),
    )(pred2d, gt2d)

    loss_sum = jnp.sum(loss_part)
    mask_sum = jnp.sum(cnt_part)
    if reduction == "mean":
        return loss_sum / jnp.maximum(mask_sum, 1.0)
    return loss_sum


def _reference(pred_offsets, gt_offsets, reduction="mean", eps=1e-8):
    mask = jnp.logical_not(jnp.any(gt_offsets < 0, axis=-1)).astype(jnp.float32)
    pred_starts, pred_ends = -pred_offsets[..., 0], pred_offsets[..., 1]
    gt_starts, gt_ends = -gt_offsets[..., 0], gt_offsets[..., 1]
    inter = jnp.clip(jnp.minimum(pred_ends, gt_ends)
                     - jnp.maximum(pred_starts, gt_starts), 0)
    unions = (pred_ends - pred_starts) + (gt_ends - gt_starts) - inter
    iou = inter / jnp.clip(unions, eps)
    loss = (1.0 - iou) * mask
    if reduction == "mean":
        return jnp.sum(loss) / jnp.maximum(jnp.sum(mask), 1.0)
    return jnp.sum(loss)


if __name__ == "__main__":
    key = jax.random.PRNGKey(0)
    k1, k2, k3, k4, k5, k6 = jax.random.split(key, 6)

    # Small case matching the module's (N, L, 2) layout (exercises the rare
    # unaligned pad fallback: 2*N*L = 32 is not a multiple of 128).
    N, L = 2, 8
    pred_small = jax.random.uniform(k1, (N, L, 2), jnp.float32, minval=0.0, maxval=4.0)
    gt_small = jax.random.uniform(k2, (N, L, 2), jnp.float32, minval=-1.0, maxval=4.0)
    for reduction in ("mean", "sum"):
        out = jax.block_until_ready(
            generalized_iou_loss(pred_small, gt_small, reduction=reduction))
        ref = _reference(pred_small, gt_small, reduction=reduction)
        assert jnp.allclose(out, ref, atol=1e-4, rtol=1e-4), (reduction, out, ref)

    # Aligned, pad-free case with a ragged 2-block grid (rows=10, row_tile=8):
    # exercises the in-kernel out-of-bounds row masking.
    N2, L2 = 20, 256
    pred_r = jax.random.uniform(k3, (N2, L2, 2), jnp.float32, minval=0.0, maxval=4.0)
    gt_r = jax.random.uniform(k4, (N2, L2, 2), jnp.float32, minval=-1.0, maxval=4.0)
    out = jax.block_until_ready(generalized_iou_loss(pred_r, gt_r, reduction="mean"))
    ref = _reference(pred_r, gt_r, reduction="mean")
    assert jnp.allclose(out, ref, atol=1e-4, rtol=1e-4), (out, ref)

    # Aligned multi-block "parallel" grid (rows=32 -> 2 blocks of 16 x 1024).
    N3, L3 = 4, 4096
    pred_b = jax.random.uniform(k5, (N3, L3, 2), jnp.float32, minval=0.0, maxval=4.0)
    gt_b = jax.random.uniform(k6, (N3, L3, 2), jnp.float32, minval=-1.0, maxval=4.0)
    out = jax.block_until_ready(generalized_iou_loss(pred_b, gt_b, reduction="mean"))
    ref = _reference(pred_b, gt_b, reduction="mean")
    assert jnp.allclose(out, ref, atol=1e-4, rtol=1e-4), (out, ref)

    print("KERNEL_OK")
</pallas_src>

<mosaic_0001>
module attributes {stable_mosaic.version = 11 : i64} {
  func.func @_giou_tile_kernel(%arg0: i32, %arg1: memref<1x256xf32, #tpu.memory_space<vmem>>, %arg2: memref<1x256xf32, #tpu.memory_space<vmem>>, %arg3: memref<1x1xf32, #tpu.memory_space<smem>>, %arg4: memref<1x1xf32, #tpu.memory_space<smem>>) attributes {dimension_semantics = [#tpu.dimension_semantics<parallel>], iteration_bounds = array<i64: 1>, scalar_prefetch = 0 : i64, scratch_operands = 0 : i64, tpu.core_type = #tpu.core_type<tc>, window_params = [{transform_indices = @transform_0, window_bounds = array<i64: 1, 256>}, {transform_indices = @transform_1, window_bounds = array<i64: 1, 256>}, {transform_indices = @transform_2, window_bounds = array<i64: 1, 1>}, {transform_indices = @transform_3, window_bounds = array<i64: 1, 1>}]} {
    %c0 = arith.constant 0 : index
    %c0_0 = arith.constant 0 : index
    %0 = vector.load %arg1[%c0, %c0_0] : memref<1x256xf32, #tpu.memory_space<vmem>>, vector<1x256xf32>
    %c0_1 = arith.constant 0 : index
    %c0_2 = arith.constant 0 : index
    %1 = vector.load %arg2[%c0_1, %c0_2] : memref<1x256xf32, #tpu.memory_space<vmem>>, vector<1x256xf32>
    %c255_i32 = arith.constant 255 : i32
    %2 = tpu.dynamic_rotate %0 by %c255_i32 dim 1 : vector<1x256xf32>, i32 -> vector<1x256xf32>
    %c255_i32_3 = arith.constant 255 : i32
    %3 = tpu.dynamic_rotate %1 by %c255_i32_3 dim 1 : vector<1x256xf32>, i32 -> vector<1x256xf32>
    %4 = tpu.iota {dimensions = array<i32: 1>} : vector<1x256xi32>
    %c255_i32_4 = arith.constant 255 : i32
    %5 = tpu.dynamic_rotate %4 by %c255_i32_4 dim 1 : vector<1x256xi32>, i32 -> vector<1x256xi32>
    %c1_i32 = arith.constant 1 : i32
    %6 = vector.broadcast %c1_i32 : i32 to vector<1x256xi32>
    %7 = arith.xori %4, %6 : vector<1x256xi32>
    %8 = arith.cmpi eq, %5, %7 : vector<1x256xi32>
    %cst = arith.constant 0.000000e+00 : f32
    %9 = vector.broadcast %cst : f32 to vector<1x256xf32>
    %10 = arith.cmpf oge, %1, %9 : vector<1x256xf32>
    %cst_5 = arith.constant 0.000000e+00 : f32
    %11 = vector.broadcast %cst_5 : f32 to vector<1x256xf32>
    %12 = arith.cmpf oge, %3, %11 : vector<1x256xf32>
    %13 = arith.andi %10, %12 : vector<1x256xi1>
    %14 = arith.andi %8, %13 : vector<1x256xi1>
    %15 = arith.minimumf %0, %1 : vector<1x256xf32>
    %16 = arith.minimumf %2, %3 : vector<1x256xf32>
    %17 = arith.addf %15, %16 : vector<1x256xf32>
    %cst_6 = arith.constant 0.000000e+00 : f32
    %18 = vector.broadcast %cst_6 : f32 to vector<1x256xf32>
    %19 = arith.maximumf %17, %18 : vector<1x256xf32>
    %20 = arith.addf %0, %2 : vector<1x256xf32>
    %21 = arith.addf %1, %3 : vector<1x256xf32>
    %22 = arith.addf %20, %21 : vector<1x256xf32>
    %23 = arith.subf %22, %19 : vector<1x256xf32>
    %cst_7 = arith.constant 9.99999993E-9 : f32
    %24 = vector.broadcast %cst_7 : f32 to vector<1x256xf32>
    %25 = arith.maximumf %23, %24 : vector<1x256xf32>
    %26 = tpu.reciprocal %25 {approx = true} : vector<1x256xf32> -> vector<1x256xf32>
    %27 = arith.mulf %25, %26 : vector<1x256xf32>
    %cst_8 = arith.constant 2.000000e+00 : f32
    %28 = vector.broadcast %cst_8 : f32 to vector<1x256xf32>
    %29 = arith.subf %28, %27 : vector<1x256xf32>
    %30 = arith.mulf %26, %29 : vector<1x256xf32>
    %31 = arith.mulf %19, %30 : vector<1x256xf32>
    %cst_9 = arith.constant 1.000000e+00 : f32
    %32 = vector.broadcast %cst_9 : f32 to vector<1x256xf32>
    %33 = arith.subf %32, %31 : vector<1x256xf32>
    %cst_10 = arith.constant 0.000000e+00 : f32
    %34 = vector.broadcast %cst_10 : f32 to vector<1x256xf32>
    %35 = arith.select %14, %33, %34 : vector<1x256xi1>, vector<1x256xf32>
    %36 = vector.shape_cast %35 : vector<1x256xf32> to vector<1x1x256xf32>
    %cst_11 = arith.constant dense<0.000000e+00> : vector<1xf32>
    %37 = vector.multi_reduction <add>, %36, %cst_11 [1, 2] : vector<1x1x256xf32> to vector<1xf32>
    %38 = vector.shape_cast %37 : vector<1xf32> to vector<1x1x1xf32>
    %39 = vector.extract %38[0, 0, 0] : f32 from vector<1x1x1xf32>
    %c0_12 = arith.constant 0 : index
    %c0_13 = arith.constant 0 : index
    %40 = memref.load %arg3[%c0_12, %c0_13] : memref<1x1xf32, #tpu.memory_space<smem>>
    memref.store %39, %arg3[%c0_12, %c0_13] : memref<1x1xf32, #tpu.memory_space<smem>>
    %41 = arith.extui %14 : vector<1x256xi1> to vector<1x256xi32>
    %42 = arith.sitofp %41 : vector<1x256xi32> to vector<1x256xf32>
    %43 = vector.shape_cast %42 : vector<1x256xf32> to vector<1x1x256xf32>
    %cst_14 = arith.constant dense<0.000000e+00> : vector<1xf32>
    %44 = vector.multi_reduction <add>, %43, %cst_14 [1, 2] : vector<1x1x256xf32> to vector<1xf32>
    %45 = vector.shape_cast %44 : vector<1xf32> to vector<1x1x1xf32>
    %46 = vector.extract %45[0, 0, 0] : f32 from vector<1x1x1xf32>
    %c0_15 = arith.constant 0 : index
    %c0_16 = arith.constant 0 : index
    %47 = memref.load %arg4[%c0_15, %c0_16] : memref<1x1xf32, #tpu.memory_space<smem>>
    memref.store %46, %arg4[%c0_15, %c0_16] : memref<1x1xf32, #tpu.memory_space<smem>>
    return
  }
  func.func @transform_0(%arg0: i32) -> (i32, i32) {
    %c0_i32 = arith.constant 0 : i32
    %c0_i32_0 = arith.constant 0 : i32
    return %arg0, %c0_i32 : i32, i32
  }
  func.func @transform_1(%arg0: i32) -> (i32, i32) {
    %c0_i32 = arith.constant 0 : i32
    %c0_i32_0 = arith.constant 0 : i32
    return %arg0, %c0_i32 : i32, i32
  }
  func.func @transform_2(%arg0: i32) -> (i32, i32) {
    %c0_i32 = arith.constant 0 : i32
    %c0_i32_0 = arith.constant 0 : i32
    return %arg0, %c0_i32 : i32, i32
  }
  func.func @transform_3(%arg0: i32) -> (i32, i32) {
    %c0_i32 = arith.constant 0 : i32
    %c0_i32_0 = arith.constant 0 : i32
    return %arg0, %c0_i32 : i32, i32
  }
}

</mosaic_0001>

<llo_original>
// kernel: tpu_custom_call.1
$region0: #{tpu_custom_call.1}
  #allocation0 [shape = 'u32[]', space=smem, size = 0x4, offset = 0x4, fixed_abs, tag = 'smem constant byte address 0x4 - core index']
  #allocation1 [shape = 'u32[72,128]{1,0:T(1,128)}', space=vmem, size = 0x9000, scoped, tag = 'internal scratch']
  %s0 = inlined_call_operand.hbm [shape: f32[1,256], index: 0, kind: input, shape index: {}]
  %s1 = inlined_call_operand.hbm [shape: f32[1,256], index: 1, kind: input, shape index: {}]
  %s2 = inlined_call_operand.hbm [shape: f32[1,1], index: 2, kind: output, shape index: {0}]
  %s3 = inlined_call_operand.hbm [shape: f32[1,1], index: 3, kind: output, shape index: {1}]
  %4 = xla_tuple %s2, %s3
  %s5 = sld [smem:[#allocation0]]
  $region34: #{tpu_custom_call.1} parent=0
    _
  %s7 = ssub.s32 1, %s5
  %s8 = scalar_select 0, %s7, %s5
  $region1: #{tpu_custom_call.1} parent=0
    #allocation2 [shape = 'u8[1024]{0}', space=vmem, size = 0x400, scoped, tag = 'input window, operand 0, single buffered']
    #allocation3 [shape = 's32[1]{0}', space=sflag, size = 0x4, scoped, tag = 'scoped memory for tpu_custom_call.1']
    #allocation4 [shape = 's32[1]{0}', space=sflag, size = 0x4, scoped, tag = 'scoped memory for tpu_custom_call.1']
    #allocation5 [shape = 'u8[1024]{0}', space=vmem, size = 0x400, scoped, tag = 'input window, operand 1, single buffered']
    #allocation6 [shape = 's32[1]{0}', space=sflag, size = 0x4, scoped, tag = 'scoped memory for tpu_custom_call.1']
    #allocation7 [shape = 'u8[512]{0}', space=smem, size = 0x200, scoped, tag = 'output window, operand 0, single buffered']
    #allocation8 [shape = 'u8[512]{0}', space=smem, size = 0x200, scoped, tag = 'output window, operand 1, single buffered']
    #allocation9 [shape = 's32[1]{0}', space=sflag, size = 0x4, scoped, tag = 'scoped memory for tpu_custom_call.1']
    %9 = vsyncpa [#allocation3], 0
    %10 = vsyncpa [#allocation6], 0
    %11 = vsyncpa [#allocation4], 0
    %12 = vsyncpa [#allocation9], 0
    // Predicated region
    $region2: #{tpu_custom_call.1} parent=1 // pred_check
      _
    $region3: #{tpu_custom_call.1} parent=1 // pred_check_branch
      %14 = sbr.rel (0) target = $region5
    $region4: #{tpu_custom_call.1} parent=1 // pred_region
      %16 = vsyncadd [#allocation3], 0
      %s18 = sshll.u32 %s0, 4
      %s19 = int_to_ptr.hbm [resolvable:$true] %s18
      %s20 = sshll.u32 [#allocation2], 4
      %s21 = int_to_ptr.vmem [resolvable:$true] %s20
      %23 = dma.hbm_to_vmem [thread:$0]  %s19, 32, %s21, [#allocation3]
    $region5: #{tpu_custom_call.1} parent=1 // pred_fallthru
      _
    // Predicated region
    $region6: #{tpu_custom_call.1} parent=1 // pred_check
      _
    $region7: #{tpu_custom_call.1} parent=1 // pred_check_branch
      %25 = sbr.rel (0) target = $region9
    $region8: #{tpu_custom_call.1} parent=1 // pred_region
      %27 = vsyncadd [#allocation6], 0
      %s29 = sshll.u32 %s1, 4
      %s30 = int_to_ptr.hbm [resolvable:$true] %s29
      %s31 = sshll.u32 [#allocation5], 4
      %s32 = int_to_ptr.vmem [resolvable:$true] %s31
      %34 = dma.hbm_to_vmem [thread:$0]  %s30, 32, %s32, [#allocation6]
    $region9: #{tpu_custom_call.1} parent=1 // pred_fallthru
      _
    // Predicated region
    $region10: #{tpu_custom_call.1} parent=1 // pred_check
      _
    $region11: #{tpu_custom_call.1} parent=1 // pred_check_branch
      %36 = sbr.rel (0) target = $region13
    $region12: #{tpu_custom_call.1} parent=1 // pred_region
      %38 = dma.done [#allocation3], 32
    $region13: #{tpu_custom_call.1} parent=1 // pred_fallthru
      _
    // Predicated region
    $region14: #{tpu_custom_call.1} parent=1 // pred_check
      _
    $region15: #{tpu_custom_call.1} parent=1 // pred_check_branch
      %40 = sbr.rel (0) target = $region17
    $region16: #{tpu_custom_call.1} parent=1 // pred_region
      %42 = dma.done [#allocation6], 32
    $region17: #{tpu_custom_call.1} parent=1 // pred_fallthru
      _
    %v43 = vld [vmem:[#allocation2] sm:$0x3]
    %v44 = vld [vmem:[#allocation5] sm:$0x3]
    %v46 = vperm.slane %v43, 0
    %v47 = vperm.slane %v43, 1
    %50 = vrot.lane.b32.xlu0 %v46, 127
    %v51 = vpop.permute.xlu0 %50
    %52 = vrot.lane.b32.xlu0 %v47, 127
    %v53 = vpop.permute.xlu0 %52
    %v54 = vlaneseq
    %v55 = vand.u32 %v54, 127
    %vm56 = vcmp.lt.s32.totalorder %v55, 127
    %v57 = vsel %vm56, %v51, %v53
    %v58 = vsel %vm56, %v53, %v51
    %v60 = vperm.slane %v44, 0
    %v61 = vperm.slane %v44, 1
    %64 = vrot.lane.b32.xlu0 %v60, 127
    %v65 = vpop.permute.xlu0 %64
    %66 = vrot.lane.b32.xlu0 %v61, 127
    %v67 = vpop.permute.xlu0 %66
    %v68 = vsel %vm56, %v65, %v67
    %v69 = vsel %vm56, %v67, %v65
    %v70 = vadd.s32 %v55, 128
    %71 = vrot.lane.b32.xlu0 %v55, 127
    %v72 = vpop.permute.xlu0 %71
    %73 = vrot.lane.b32.xlu0 %v70, 127
    %v74 = vpop.permute.xlu0 %73
    %v75 = vsel %vm56, %v72, %v74
    %v76 = vsel %vm56, %v74, %v72
    %v77 = vxor.u32 %v55, 1
    %v78 = vxor.u32 %v70, 1
    %vm79 = vcmp.eq.s32.totalorder %v75, %v77
    %vm80 = vcmp.eq.s32.totalorder %v76, %v78
    %vm81 = vcmp.ge.f32.partialorder %v44, 0.0
    %vm82 = vcmp.ge.f32.partialorder %v68, 0.0
    %vm83 = vcmp.ge.f32.partialorder %v69, 0.0
    %v84 = vsel %vm82, 1, 0
    %v85 = vsel %vm83, 1, 0
    %v86 = vrot.slane %v85, 7
    %vm87 = vcmask 1040384
    %v88 = vsel %vm87, %v84, %v86
    %vm89 = vcmp.ne.s32.totalorder %v88, 0
    %vm90 = vmand %vm81, %vm89
    %v91 = vsel %vm90, 1, 0
    %v92 = vperm.slane %v91, 0
    %v93 = vperm.slane %v91, 1
    %vm94 = vcmp.ne.s32.totalorder %v92, 0
    %vm95 = vcmp.ne.s32.totalorder %v93, 0
    %vm96 = vmand %vm79, %vm94
    %vm97 = vmand %vm80, %vm95
    %v98 = vmin.f32 %v43, %v44
    %v99 = vmin.f32 %v57, %v68
    %v100 = vmin.f32 %v58, %v69
    %v103 = vrot.slane %v100, 7
    %v104 = vsel %vm87, %v99, %v103
    %v106 = vadd.f32 %v98, %v104
    %v107 = vmax.f32 %v106, 0.0
    %v110 = vrot.slane %v58, 7
    %v111 = vsel %vm87, %v57, %v110
    %v113 = vadd.f32 %v43, %v111
    %v116 = vrot.slane %v69, 7
    %v117 = vsel %vm87, %v68, %v116
    %v119 = vadd.f32 %v44, %v117
    %v120 = vadd.f32 %v113, %v119
    %v121 = vsub.f32 %v120, %v107
    %v122 = vmax.f32 %v121, 1e-08
    %v123 = vrcp.pop %v122
    %v124 = vmul.f32 %v122, %v123
    %v125 = vsub.f32 2.0, %v124
    %v126 = vmul.f32 %v123, %v125
    %v127 = vmul.f32 %v107, %v126
    %v128 = vsub.f32 1.0, %v127
    %v130 = vperm.slane %v128, 0
    %v131 = vperm.slane %v128, 1
    %v134 = vsel %vm96, %v130, 0.0
    %v135 = vsel %vm97, %v131, 0.0
    %v136 = vsel %vm87, %v134, 0.0
    %v137 = vsel %vm87, %v135, 0.0
    %v138 = vadd.f32 %v136, %v137
    %139 = vadd.xlane.f32.xlu0 %v138
    %v140 = vpop.xlane.xlu0 %139
    %v141 = vrot.slane %v140, 4
    %v142 = vadd.f32 %v140, %v141
    %v143 = vrot.slane %v142, 2
    %v144 = vadd.f32 %v142, %v143
    %v145 = vrot.slane %v144, 1
    %v146 = vadd.f32 %v144, %v145
    %s147 = vtos %v146
    %s148 = scalar_lea.smem [#allocation7], 0
    %149 = sst [smem:[%s148]] %s147
    %v150 = vsel %vm96, 1, 0
    %v151 = vsel %vm97, 1, 0
    %v152 = vcvt.s32.f32 %v150
    %v153 = vcvt.s32.f32 %v151
    %v154 = vsel %vm87, %v152, 0.0
    %v155 = vsel %vm87, %v153, 0.0
    %v156 = vadd.f32 %v154, %v155
    %157 = vadd.xlane.f32.xlu0 %v156
    %v158 = vpop.xlane.xlu0 %157
    %v159 = vrot.slane %v158, 4
    %v160 = vadd.f32 %v158, %v159
    %v161 = vrot.slane %v160, 2
    %v162 = vadd.f32 %v160, %v161
    %v163 = vrot.slane %v162, 1
    %v164 = vadd.f32 %v162, %v163
    %s165 = vtos %v164
    %s166 = scalar_lea.smem [#allocation8], 0
    %167 = sst [smem:[%s166]] %s165
    // Predicated region
    $region18: #{tpu_custom_call.1} parent=1 // pred_check
      _
    $region19: #{tpu_custom_call.1} parent=1 // pred_check_branch
      %169 = sbr.rel (0) target = $region21
    $region20: #{tpu_custom_call.1} parent=1 // pred_region
      %171 = vsyncadd [#allocation4], 0
      %s173 = sshll.u32 %s2, 4
      %s174 = int_to_ptr.hbm [resolvable:$true] %s173
      %176 = dma.smem_to_hbm [#allocation7], 16, %s174, [#allocation4]
    $region21: #{tpu_custom_call.1} parent=1 // pred_fallthru
      _
    // Predicated region
    $region22: #{tpu_custom_call.1} parent=1 // pred_check
      _
    $region23: #{tpu_custom_call.1} parent=1 // pred_check_branch
      %178 = sbr.rel (0) target = $region25
    $region24: #{tpu_custom_call.1} parent=1 // pred_region
      %180 = vsyncadd [#allocation9], 0
      %s182 = sshll.u32 %s3, 4
      %s183 = int_to_ptr.hbm [resolvable:$true] %s182
      %185 = dma.smem_to_hbm [#allocation8], 16, %s183, [#allocation9]
    $region25: #{tpu_custom_call.1} parent=1 // pred_fallthru
      _
    // Predicated region
    $region26: #{tpu_custom_call.1} parent=1 // pred_check
      _
    $region27: #{tpu_custom_call.1} parent=1 // pred_check_branch
      %187 = sbr.rel (0) target = $region29
    $region28: #{tpu_custom_call.1} parent=1 // pred_region
      %189 = dma.done [#allocation4], 16
    $region29: #{tpu_custom_call.1} parent=1 // pred_fallthru
      _
    // Predicated region
    $region30: #{tpu_custom_call.1} parent=1 // pred_check
      _
    $region31: #{tpu_custom_call.1} parent=1 // pred_check_branch
      %191 = sbr.rel (0) target = $region33
    $region32: #{tpu_custom_call.1} parent=1 // pred_region
      %193 = dma.done [#allocation9], 16
    $region33: #{tpu_custom_call.1} parent=1 // pred_fallthru
      _
    %194 = sfence
    %195 = vsyncpa [#allocation3], 1
    %196 = vsyncpa [#allocation6], 1
    %197 = vsyncpa [#allocation4], 1
    %198 = vsyncpa [#allocation9], 1

</llo_original>
